<compile_context>
chip_gen: v5e
topology: v5e:2x2
jax: 0.10.0
libtpu: 0.0.40
codegen_flags: <defaults>
</compile_context>

<pallas_src>
import functools

import jax
import jax.numpy as jnp
from jax.experimental import pallas as pl
from jax.experimental.pallas import tpu as pltpu


def _round_up(v, m):
    return (v + m - 1) // m * m


def _cdiv(a, b):
    return -(-a // b)


# --------------------------------------------------------------------------- #
# Kernel
# --------------------------------------------------------------------------- #
def _ffn_kernel(x_ref, w1_ref, b1_ref, w2_ref, b2_ref, o_ref, acc_ref):
    # x_ref  : (tm, Hp)  bf16      w1_ref : (Hp, tp) bf16    b1_ref : (1, tp) f32
    # w2_ref : (tp, Hp)  bf16      b2_ref : (1, Hp)  f32
    # o_ref  : (tm, Hp)  out dtype acc_ref: (tm, Hp) f32 scratch (resident over k)
    k = pl.program_id(1)

    # fc1 partial over this P-tile (MXU, f32 accumulation).
    h = jnp.dot(x_ref[...], w1_ref[...], preferred_element_type=jnp.float32)
    h = jnp.maximum(h + b1_ref[...], 0.0)  # bias + ReLU in f32 (VPU)
    # TODO(synk): training-mode dropout (stateful PRNG mask) omitted; eval semantics only.
    acc_part = jnp.dot(h.astype(w2_ref.dtype), w2_ref[...],
                       preferred_element_type=jnp.float32)

    @pl.when(k == 0)
    def _():
        acc_ref[...] = acc_part          # fold zero-init into first accumulation

    @pl.when(k != 0)
    def _():
        acc_ref[...] += acc_part

    @pl.when(k == pl.num_programs(1) - 1)
    def _():
        o_ref[...] = (acc_ref[...] + b2_ref[...]).astype(o_ref.dtype)


# --------------------------------------------------------------------------- #
# VMEM / chip helpers
# --------------------------------------------------------------------------- #
def _vmem_estimate(tm, tp, h_pad, cbytes, obytes):
    """Per-grid-point VMEM footprint (double-buffered inputs/outputs + scratch)."""
    return (2 * tm * h_pad * cbytes        # x tiles
            + 2 * h_pad * tp * cbytes      # w1 tiles (streamed over k)
            + 2 * tp * h_pad * cbytes      # w2 tiles (streamed over k)
            + 2 * 8 * tp * 4               # b1 tiles (sublane-padded to 8 rows)
            + 2 * 8 * h_pad * 4            # b2 tiles
            + 2 * tm * h_pad * obytes      # out tiles
            + tm * h_pad * 4               # f32 accumulator scratch
            + tm * tp * 4                  # fc1 intermediate (f32)
            + tm * tp * cbytes)            # bf16 copy of h for the 2nd matmul


def _tpu_vmem_capacity_bytes():
    """Best-effort physical VMEM capacity; conservative (64 MiB) if unknown."""
    try:
        info = pltpu.get_tpu_info()
        for name in ("vmem_capacity_bytes", "vmem_size_bytes", "vmem_bytes"):
            v = getattr(info, name, None)
            if v:
                return int(v)
    except Exception:
        pass
    try:
        kind = jax.devices()[0].device_kind.lower()
        if "v7" in kind:
            return 64 << 20
        if "v5" in kind or "v6" in kind:
            return 128 << 20
    except Exception:
        pass
    return 64 << 20


def _pick_tm(m, tm_target):
    m16 = _round_up(m, 16)
    if m16 <= tm_target:
        return m16                                   # single row tile, no waste
    return max(128, (tm_target // 128) * 128)        # multi-tile: MXU-friendly


# --------------------------------------------------------------------------- #
# Jitted per-call core (weights pre-padded; only x pad/slice remains inline)
# --------------------------------------------------------------------------- #
@functools.partial(jax.jit, static_argnames=("tm", "tp", "vmem_limit"))
def _ffn_call(x, w1p, b1p, w2p, b2p, *, tm, tp, vmem_limit):
    B, S, H = x.shape
    M = B * S
    H_pad, P_pad = w1p.shape
    cd = w1p.dtype
    out_dtype = x.dtype
    M_pad = _round_up(M, tm)

    x2d = x.reshape(M, H).astype(cd)
    if M_pad != M or H_pad != H:                     # skip copy when already aligned
        x2d = jnp.pad(x2d, ((0, M_pad - M), (0, H_pad - H)))

    grid = (M_pad // tm, P_pad // tp)

    out2d = pl.pallas_call(
        _ffn_kernel,
        out_shape=jax.ShapeDtypeStruct((M_pad, H_pad), out_dtype),
        grid_spec=pltpu.PrefetchScalarGridSpec(
            num_scalar_prefetch=0,
            grid=grid,
            in_specs=[
                pl.BlockSpec((tm, H_pad), lambda i, k: (i, 0)),   # x row tile
                pl.BlockSpec((H_pad, tp), lambda i, k: (0, k)),   # w1 P-tile (streamed)
                pl.BlockSpec((1, tp),     lambda i, k: (0, k)),   # b1 P-tile
                pl.BlockSpec((tp, H_pad), lambda i, k: (k, 0)),   # w2 P-tile (streamed)
                pl.BlockSpec((1, H_pad),  lambda i, k: (0, 0)),   # b2
            ],
            out_specs=pl.BlockSpec((tm, H_pad), lambda i, k: (i, 0)),
            scratch_shapes=[pltpu.VMEM((tm, H_pad), jnp.float32)],
        ),
        compiler_params=pltpu.CompilerParams(
            dimension_semantics=("parallel", "arbitrary"),
            vmem_limit_bytes=vmem_limit,
        ),
    )(x2d, w1p, b1p, w2p, b2p)

    if M_pad != M or H_pad != H:
        out2d = out2d[:M, :H]
    return out2d.reshape(B, S, H)


# --------------------------------------------------------------------------- #
# Factory: pads/casts weights once, fixes tp/P_pad, returns a callable f(x)
# --------------------------------------------------------------------------- #
def make_positionwise_ffn(w1, b1, w2, b2, *, tm=None, tp=None,
                          compute_dtype=jnp.bfloat16):
    """w1: [hid, pf], b1: [pf]; w2: [pf, hid], b2: [hid] (pre-transposed [in, out])."""
    H, P = w1.shape
    cd = jnp.dtype(compute_dtype)
    cbytes = cd.itemsize
    obytes_budget = 4  # worst-case f32 output for the init-time budget fit

    vmem_cap = _tpu_vmem_capacity_bytes()
    if vmem_cap <= (64 << 20):
        # v7x-class: 64 MiB VMEM/TC, 2 TCs share HBM -> stay well under 64 MiB.
        tile_budget = 50 << 20
        vmem_cap_limit = 56 << 20
        tm_target = tm if tm is not None else 512
        tp_target = tp if tp is not None else 512
    else:
        # v5e / v6e: 128 MiB physical VMEM; allow large tm for arithmetic intensity.
        tile_budget = 88 << 20
        vmem_cap_limit = 100 << 20
        tm_target = tm if tm is not None else 1024
        tp_target = tp if tp is not None else 1024

    # Lane-dense padding of H (multiple of 128 -> unmasked vst).
    H_pad = _round_up(H, 128)

    # Fit tp under the VMEM budget FIRST (weight HBM traffic is independent of
    # tp, so shrinking tp preserves the large-tm arithmetic-intensity win).
    tp_t = max(128, _round_up(tp_target, 128))
    while tp_t > 256 and _vmem_estimate(tm_target, tp_t, H_pad,
                                        cbytes, obytes_budget) > tile_budget:
        tp_t //= 2

    # Choose tp so it divides P_pad tightly (no dead all-zero k tiles).
    P128 = _round_up(P, 128)
    n_k = _cdiv(P128, tp_t)
    tp_eff = _round_up(_cdiv(P128, n_k), 128)
    P_pad = n_k * tp_eff

    # One-time weight pad + cast (hoisted out of the per-call hot path).
    w1p = jnp.zeros((H_pad, P_pad), cd).at[:H, :P].set(w1.astype(cd))
    w2p = jnp.zeros((P_pad, H_pad), cd).at[:P, :H].set(w2.astype(cd))
    b1p = jnp.zeros((1, P_pad), jnp.float32).at[0, :P].set(b1.astype(jnp.float32))
    b2p = jnp.zeros((1, H_pad), jnp.float32).at[0, :H].set(b2.astype(jnp.float32))

    def ffn(x):
        assert x.ndim == 3 and x.shape[-1] == H, "expected [B, S, hid_dim]"
        B, S, _ = x.shape
        M = B * S
        obytes = jnp.dtype(x.dtype).itemsize

        tm_eff = _pick_tm(M, tm_target)
        while tm_eff > 128 and _vmem_estimate(tm_eff, tp_eff, H_pad,
                                              cbytes, obytes) > tile_budget:
            tm_eff = max(128, tm_eff // 2)

        est = _vmem_estimate(tm_eff, tp_eff, H_pad, cbytes, obytes)
        vmem_limit = int(min(max(int(est * 1.25) + (4 << 20), 32 << 20),
                             vmem_cap_limit))
        return _ffn_call(x, w1p, b1p, w2p, b2p,
                         tm=tm_eff, tp=tp_eff, vmem_limit=vmem_limit)

    return ffn


# --------------------------------------------------------------------------- #
# Reference (same bf16 input cast, f32 math; remaining delta is MXU/bf16
# rounding of the fc1 intermediate, which the kernel carries in bf16).
# --------------------------------------------------------------------------- #
def _reference(x, w1, b1, w2, b2, compute_dtype=jnp.bfloat16):
    f32 = jnp.float32
    xc = x.astype(compute_dtype).astype(f32)
    w1c = w1.astype(compute_dtype).astype(f32)
    w2c = w2.astype(compute_dtype).astype(f32)
    h = jnp.maximum(jnp.einsum("bsh,hp->bsp", xc, w1c) + b1, 0.0)
    return jnp.einsum("bsp,ph->bsh", h, w2c) + b2


if __name__ == "__main__":
    # Small shapes consistent with the module: batch=2, seq=8, hid_dim=32, pf_dim=64.
    B, S, HID, PF = 2, 8, 32, 64

    key = jax.random.PRNGKey(0)
    kx, k1, k2, k3, k4 = jax.random.split(key, 5)

    x = jax.random.normal(kx, (B, S, HID), dtype=jnp.float32)

    # PyTorch Linear stores weight as [out, in]; we keep them pre-transposed as
    # [in, out] so the hot path is x @ W.
    bound1 = 1.0 / (HID ** 0.5)
    w1 = jax.random.uniform(k1, (HID, PF), minval=-bound1, maxval=bound1, dtype=jnp.float32)
    b1 = jax.random.uniform(k2, (PF,), minval=-bound1, maxval=bound1, dtype=jnp.float32)
    bound2 = 1.0 / (PF ** 0.5)
    w2 = jax.random.uniform(k3, (PF, HID), minval=-bound2, maxval=bound2, dtype=jnp.float32)
    b2 = jax.random.uniform(k4, (HID,), minval=-bound2, maxval=bound2, dtype=jnp.float32)

    # Init-time weight pad/cast (done once), then call the kernel.
    ffn = make_positionwise_ffn(w1, b1, w2, b2)
    out = jax.block_until_ready(ffn(x))

    ref = _reference(x, w1, b1, w2, b2)
    assert out.shape == (B, S, HID)
    assert jnp.allclose(out, ref, atol=2e-2, rtol=2e-2), "mismatch vs reference"

    print("KERNEL_OK")
</pallas_src>

<mosaic_0001>
module attributes {stable_mosaic.version = 11 : i64} {
  func.func @_ffn_kernel(%arg0: i32, %arg1: i32, %arg2: memref<16x128xbf16, #tpu.memory_space<vmem>>, %arg3: memref<128x128xbf16, #tpu.memory_space<vmem>>, %arg4: memref<1x128xf32, #tpu.memory_space<vmem>>, %arg5: memref<128x128xbf16, #tpu.memory_space<vmem>>, %arg6: memref<1x128xf32, #tpu.memory_space<vmem>>, %arg7: memref<16x128xf32, #tpu.memory_space<vmem>>, %arg8: memref<16x128xf32, #tpu.memory_space<vmem>>) attributes {dimension_semantics = [#tpu.dimension_semantics<parallel>, #tpu.dimension_semantics<arbitrary>], iteration_bounds = array<i64: 1, 1>, scalar_prefetch = 0 : i64, scratch_operands = 1 : i64, tpu.core_type = #tpu.core_type<tc>, window_params = [{transform_indices = @transform_0, window_bounds = array<i64: 16, 128>}, {transform_indices = @transform_1, window_bounds = array<i64: 128, 128>}, {transform_indices = @transform_2, window_bounds = array<i64: 1, 128>}, {transform_indices = @transform_3, window_bounds = array<i64: 128, 128>}, {pipeline_mode = #tpu.pipeline_mode<synchronous>, transform_indices = @transform_4, window_bounds = array<i64: 1, 128>}, {transform_indices = @transform_5, window_bounds = array<i64: 16, 128>}]} {
    %c0 = arith.constant 0 : index
    %c0_0 = arith.constant 0 : index
    %0 = vector.load %arg2[%c0, %c0_0] : memref<16x128xbf16, #tpu.memory_space<vmem>>, vector<16x128xbf16>
    %c0_1 = arith.constant 0 : index
    %c0_2 = arith.constant 0 : index
    %1 = vector.load %arg3[%c0_1, %c0_2] : memref<128x128xbf16, #tpu.memory_space<vmem>>, vector<128x128xbf16>
    %cst = arith.constant dense<0.000000e+00> : vector<16x128xf32>
    %2 = tpu.matmul %0, %1, %cst {dimension_numbers = #tpu.dot_dimension_numbers<[1], [0], [0], [1], [0, 0, 1, 1], [], []>} : vector<16x128xbf16>, vector<128x128xbf16>, vector<16x128xf32> -> vector<16x128xf32>
    %c0_3 = arith.constant 0 : index
    %c0_4 = arith.constant 0 : index
    %3 = vector.load %arg4[%c0_3, %c0_4] : memref<1x128xf32, #tpu.memory_space<vmem>>, vector<1x128xf32>
    %4 = vector.broadcast %3 : vector<1x128xf32> to vector<16x128xf32>
    %5 = arith.addf %2, %4 : vector<16x128xf32>
    %cst_5 = arith.constant 0.000000e+00 : f32
    %6 = vector.broadcast %cst_5 : f32 to vector<16x128xf32>
    %7 = arith.maximumf %5, %6 : vector<16x128xf32>
    %8 = arith.truncf %7 : vector<16x128xf32> to vector<16x128xbf16>
    %c0_6 = arith.constant 0 : index
    %c0_7 = arith.constant 0 : index
    %9 = vector.load %arg5[%c0_6, %c0_7] : memref<128x128xbf16, #tpu.memory_space<vmem>>, vector<128x128xbf16>
    %cst_8 = arith.constant dense<0.000000e+00> : vector<16x128xf32>
    %10 = tpu.matmul %8, %9, %cst_8 {dimension_numbers = #tpu.dot_dimension_numbers<[1], [0], [0], [1], [0, 0, 1, 1], [], []>} : vector<16x128xbf16>, vector<128x128xbf16>, vector<16x128xf32> -> vector<16x128xf32>
    %c0_i32 = arith.constant 0 : i32
    %11 = arith.cmpi eq, %arg1, %c0_i32 : i32
    %12 = arith.extui %11 : i1 to i32
    %c0_i32_9 = arith.constant 0 : i32
    %13 = arith.cmpi ne, %12, %c0_i32_9 : i32
    scf.if %13 {
      %c0_14 = arith.constant 0 : index
      %c0_15 = arith.constant 0 : index
      %20 = vector.load %arg8[%c0_14, %c0_15] : memref<16x128xf32, #tpu.memory_space<vmem>>, vector<16x128xf32>
      tpu.vector_store %arg8[%c0_14, %c0_15], %10 {strides = array<i32>} : memref<16x128xf32, #tpu.memory_space<vmem>>, vector<16x128xf32>,
    } else {
    }
    %c0_i32_10 = arith.constant 0 : i32
    %14 = arith.cmpi ne, %arg1, %c0_i32_10 : i32
    %15 = arith.extui %14 : i1 to i32
    %c0_i32_11 = arith.constant 0 : i32
    %16 = arith.cmpi ne, %15, %c0_i32_11 : i32
    scf.if %16 {
      %c0_14 = arith.constant 0 : index
      %c0_15 = arith.constant 0 : index
      %20 = vector.load %arg8[%c0_14, %c0_15] : memref<16x128xf32, #tpu.memory_space<vmem>>, vector<16x128xf32>
      %21 = arith.addf %20, %10 : vector<16x128xf32>
      %c0_16 = arith.constant 0 : index
      %c0_17 = arith.constant 0 : index
      %22 = vector.load %arg8[%c0_16, %c0_17] : memref<16x128xf32, #tpu.memory_space<vmem>>, vector<16x128xf32>
      tpu.vector_store %arg8[%c0_16, %c0_17], %21 {strides = array<i32>} : memref<16x128xf32, #tpu.memory_space<vmem>>, vector<16x128xf32>,
    } else {
    }
    %c0_i32_12 = arith.constant 0 : i32
    %17 = arith.cmpi eq, %arg1, %c0_i32_12 : i32
    %18 = arith.extui %17 : i1 to i32
    %c0_i32_13 = arith.constant 0 : i32
    %19 = arith.cmpi ne, %18, %c0_i32_13 : i32
    scf.if %19 {
      %c0_14 = arith.constant 0 : index
      %c0_15 = arith.constant 0 : index
      %20 = vector.load %arg8[%c0_14, %c0_15] : memref<16x128xf32, #tpu.memory_space<vmem>>, vector<16x128xf32>
      %c0_16 = arith.constant 0 : index
      %c0_17 = arith.constant 0 : index
      %21 = vector.load %arg6[%c0_16, %c0_17] : memref<1x128xf32, #tpu.memory_space<vmem>>, vector<1x128xf32>
      %22 = vector.broadcast %21 : vector<1x128xf32> to vector<16x128xf32>
      %23 = arith.addf %20, %22 : vector<16x128xf32>
      %c0_18 = arith.constant 0 : index
      %c0_19 = arith.constant 0 : index
      %24 = vector.load %arg7[%c0_18, %c0_19] : memref<16x128xf32, #tpu.memory_space<vmem>>, vector<16x128xf32>
      tpu.vector_store %arg7[%c0_18, %c0_19], %23 {strides = array<i32>} : memref<16x128xf32, #tpu.memory_space<vmem>>, vector<16x128xf32>,
    } else {
    }
    return
  }
  func.func @transform_0(%arg0: i32, %arg1: i32) -> (i32, i32) {
    %c0_i32 = arith.constant 0 : i32
    %c0_i32_0 = arith.constant 0 : i32
    return %arg0, %c0_i32 : i32, i32
  }
  func.func @transform_1(%arg0: i32, %arg1: i32) -> (i32, i32) {
    %c0_i32 = arith.constant 0 : i32
    %c0_i32_0 = arith.constant 0 : i32
    return %c0_i32, %arg1 : i32, i32
  }
  func.func @transform_2(%arg0: i32, %arg1: i32) -> (i32, i32) {
    %c0_i32 = arith.constant 0 : i32
    %c0_i32_0 = arith.constant 0 : i32
    return %c0_i32, %arg1 : i32, i32
  }
  func.func @transform_3(%arg0: i32, %arg1: i32) -> (i32, i32) {
    %c0_i32 = arith.constant 0 : i32
    %c0_i32_0 = arith.constant 0 : i32
    return %arg1, %c0_i32 : i32, i32
  }
  func.func @transform_4(%arg0: i32, %arg1: i32) -> (i32, i32) {
    %c0_i32 = arith.constant 0 : i32
    %c0_i32_0 = arith.constant 0 : i32
    %c0_i32_1 = arith.constant 0 : i32
    return %c0_i32, %c0_i32_0 : i32, i32
  }
  func.func @transform_5(%arg0: i32, %arg1: i32) -> (i32, i32) {
    %c0_i32 = arith.constant 0 : i32
    %c0_i32_0 = arith.constant 0 : i32
    return %arg0, %c0_i32 : i32, i32
  }
}

</mosaic_0001>

<llo_original>
// kernel: _ffn_call.1
$region0: #{_ffn_call.1}
  #allocation0 [shape = 'u32[]', space=smem, size = 0x4, offset = 0x4, fixed_abs, tag = 'smem constant byte address 0x4 - core index']
  #allocation1 [shape = 'u32[72,128]{1,0:T(1,128)}', space=vmem, size = 0x9000, scoped, tag = 'internal scratch']
  #allocation2 [shape = 'f32[16,128]{1,0:T(8,128)}', space=vmem, size = 0x2000, scoped, tag = 'scratch operand']
  %s0 = inlined_call_operand.vmem [shape: bf16[16,128], index: 0, kind: input, shape index: {}]
  %s1 = inlined_call_operand.hbm [shape: bf16[128,128], index: 1, kind: input, shape index: {}]
  %s2 = inlined_call_operand.vmem [shape: f32[1,128], index: 2, kind: input, shape index: {}]
  %s3 = inlined_call_operand.hbm [shape: bf16[128,128], index: 3, kind: input, shape index: {}]
  %s4 = inlined_call_operand.vmem [shape: f32[1,128], index: 4, kind: input, shape index: {}]
  %s5 = inlined_call_operand.vmem [shape: f32[16,128], index: 5, kind: output, shape index: {}]
  %s6 = sld [smem:[#allocation0]]
  $region50: #{_ffn_call.1} parent=0
    _
  %s8 = ssub.s32 1, %s6
  %s9 = scalar_select 0, %s8, %s6
  $region1: #{_ffn_call.1} parent=0
    #allocation3 [shape = 'u8[32768]{0}', space=vmem, size = 0x8000, scoped, tag = 'input window, operand 1, single buffered']
    #allocation4 [shape = 's32[1]{0}', space=sflag, size = 0x4, scoped, tag = 'scoped memory for _ffn_call.1']
    #allocation5 [shape = 'u8[32768]{0}', space=vmem, size = 0x8000, scoped, tag = 'input window, operand 3, single buffered']
    #allocation6 [shape = 's32[1]{0}', space=sflag, size = 0x4, scoped, tag = 'scoped memory for _ffn_call.1']
    %10 = vsyncpa [#allocation4], 0
    %11 = vsyncpa [#allocation6], 0
    // Predicated region
    $region2: #{_ffn_call.1} parent=1 // pred_check
      _
    $region3: #{_ffn_call.1} parent=1 // pred_check_branch
      %13 = sbr.rel (0) target = $region5
    $region4: #{_ffn_call.1} parent=1 // pred_region
      _
    $region5: #{_ffn_call.1} parent=1 // pred_fallthru
      _
    // Predicated region
    $region6: #{_ffn_call.1} parent=1 // pred_check
      _
    $region7: #{_ffn_call.1} parent=1 // pred_check_branch
      %15 = sbr.rel (0) target = $region9
    $region8: #{_ffn_call.1} parent=1 // pred_region
      %17 = vsyncadd [#allocation4], 0
      %s18 = sshll.u32 %s1, 4
      %s19 = int_to_ptr.hbm [resolvable:$true] %s18
      %s20 = sshll.u32 [#allocation3], 4
      %s21 = int_to_ptr.vmem [resolvable:$true] %s20
      %26 = dma.hbm_to_vmem [thread:$0]  %s19, 1024, %s21, [#allocation4], 64, 64, 4
    $region9: #{_ffn_call.1} parent=1 // pred_fallthru
      _
    // Predicated region
    $region10: #{_ffn_call.1} parent=1 // pred_check
      _
    $region11: #{_ffn_call.1} parent=1 // pred_check_branch
      %28 = sbr.rel (0) target = $region13
    $region12: #{_ffn_call.1} parent=1 // pred_region
      _
    $region13: #{_ffn_call.1} parent=1 // pred_fallthru
      _
    // Predicated region
    $region14: #{_ffn_call.1} parent=1 // pred_check
      _
    $region15: #{_ffn_call.1} parent=1 // pred_check_branch
      %30 = sbr.rel (0) target = $region17
    $region16: #{_ffn_call.1} parent=1 // pred_region
      %32 = vsyncadd [#allocation6], 0
      %s33 = sshll.u32 %s3, 4
      %s34 = int_to_ptr.hbm [resolvable:$true] %s33
      %s35 = sshll.u32 [#allocation5], 4
      %s36 = int_to_ptr.vmem [resolvable:$true] %s35
      %41 = dma.hbm_to_vmem [thread:$0]  %s34, 1024, %s36, [#allocation6], 64, 64, 4
    $region17: #{_ffn_call.1} parent=1 // pred_fallthru
      _
    // Predicated region
    $region18: #{_ffn_call.1} parent=1 // pred_check
      _
    $region19: #{_ffn_call.1} parent=1 // pred_check_branch
      %43 = sbr.rel (0) target = $region21
    $region20: #{_ffn_call.1} parent=1 // pred_region
      _
    $region21: #{_ffn_call.1} parent=1 // pred_fallthru
      _
    // Predicated region
    $region22: #{_ffn_call.1} parent=1 // pred_check
      _
    $region23: #{_ffn_call.1} parent=1 // pred_check_branch
      %45 = sbr.rel (0) target = $region25
    $region24: #{_ffn_call.1} parent=1 // pred_region
      %47 = dma.done [#allocation4], 1024
    $region25: #{_ffn_call.1} parent=1 // pred_fallthru
      _
    // Predicated region
    $region26: #{_ffn_call.1} parent=1 // pred_check
      _
    $region27: #{_ffn_call.1} parent=1 // pred_check_branch
      %49 = sbr.rel (0) target = $region29
    $region28: #{_ffn_call.1} parent=1 // pred_region
      %51 = dma.done [#allocation6], 1024
    $region29: #{_ffn_call.1} parent=1 // pred_fallthru
      _
    %v52 = vld [vmem:[%s0] sm:$0xf]
    %v53 = vld [vmem:[%s0 + $0x4] sm:$0xf]
    %v54 = vld [vmem:[#allocation3] sm:$0xf]
    %v55 = vld [vmem:[#allocation3 + $0x4] sm:$0xf]
    %v56 = vld [vmem:[#allocation3 + $0x8] sm:$0xf]
    %v57 = vld [vmem:[#allocation3 + $0xc] sm:$0xf]
    %v58 = vld [vmem:[#allocation3 + $0x10] sm:$0xf]
    %v59 = vld [vmem:[#allocation3 + $0x14] sm:$0xf]
    %v60 = vld [vmem:[#allocation3 + $0x18] sm:$0xf]
    %v61 = vld [vmem:[#allocation3 + $0x1c] sm:$0xf]
    %v62 = vld [vmem:[#allocation3 + $0x20] sm:$0xf]
    %v63 = vld [vmem:[#allocation3 + $0x24] sm:$0xf]
    %v64 = vld [vmem:[#allocation3 + $0x28] sm:$0xf]
    %v65 = vld [vmem:[#allocation3 + $0x2c] sm:$0xf]
    %v66 = vld [vmem:[#allocation3 + $0x30] sm:$0xf]
    %v67 = vld [vmem:[#allocation3 + $0x34] sm:$0xf]
    %v68 = vld [vmem:[#allocation3 + $0x38] sm:$0xf]
    %v69 = vld [vmem:[#allocation3 + $0x3c] sm:$0xf]
    %v70 = vld [vmem:[%s2] sm:$0x1]
    %v72 = vperm.slane %v70, 0
    %v76 = vunpack.c.l.b16 %v52
    %v77 = vunpack.c.l.b16 %v53
    %v78 = vpack.c.b16 %v77, %v76
    %v96 = vunpack.c.l.b16 %v54
    %v97 = vunpack.c.l.b16 %v55
    %v98 = vunpack.c.l.b16 %v56
    %v99 = vunpack.c.l.b16 %v57
    %v100 = vunpack.c.l.b16 %v58
    %v101 = vunpack.c.l.b16 %v59
    %v102 = vunpack.c.l.b16 %v60
    %v103 = vunpack.c.l.b16 %v61
    %v104 = vunpack.c.l.b16 %v62
    %v105 = vunpack.c.l.b16 %v63
    %v106 = vunpack.c.l.b16 %v64
    %v107 = vunpack.c.l.b16 %v65
    %v108 = vunpack.c.l.b16 %v66
    %v109 = vunpack.c.l.b16 %v67
    %v110 = vunpack.c.l.b16 %v68
    %v111 = vunpack.c.l.b16 %v69
    %v112 = vpack.c.b16 %v97, %v96
    %v113 = vpack.c.b16 %v99, %v98
    %v114 = vpack.c.b16 %v101, %v100
    %v115 = vpack.c.b16 %v103, %v102
    %v116 = vpack.c.b16 %v105, %v104
    %v117 = vpack.c.b16 %v107, %v106
    %v118 = vpack.c.b16 %v109, %v108
    %v119 = vpack.c.b16 %v111, %v110
    %128 = vmatpush.bf16.msra.mxu0 %v119
    %129 = vmatpush.bf16.msra.mxu0 %v118
    %130 = vmatpush.bf16.msra.mxu0 %v117
    %131 = vmatpush.bf16.msra.mxu0 %v116
    %132 = vmatpush.bf16.msra.mxu0 %v115
    %133 = vmatpush.bf16.msra.mxu0 %v114
    %134 = vmatpush.bf16.msra.mxu0 %v113
    %135 = vmatpush.bf16.msra.mxu0 %v112
    %136 = vmatmul.bf16.gmra.mxu0 %v78
    %v137 = vpop.f32.mrf.mxu0
    %v138 = vadd.f32 %v72, %v137
    %v139 = vpop.f32.mrf.mxu0
    %v140 = vadd.f32 %v72, %v139
    %141 = vdwg.mxu0
    %v142 = vmax.f32 %v138, 0.0
    %v143 = vmax.f32 %v140, 0.0
    %v144 = vpack.c.bf16 %v143, %v142
    %v145 = vld [vmem:[#allocation5] sm:$0xf]
    %v146 = vld [vmem:[#allocation5 + $0x4] sm:$0xf]
    %v147 = vld [vmem:[#allocation5 + $0x8] sm:$0xf]
    %v148 = vld [vmem:[#allocation5 + $0xc] sm:$0xf]
    %v149 = vld [vmem:[#allocation5 + $0x10] sm:$0xf]
    %v150 = vld [vmem:[#allocation5 + $0x14] sm:$0xf]
    %v151 = vld [vmem:[#allocation5 + $0x18] sm:$0xf]
    %v152 = vld [vmem:[#allocation5 + $0x1c] sm:$0xf]
    %v153 = vld [vmem:[#allocation5 + $0x20] sm:$0xf]
    %v154 = vld [vmem:[#allocation5 + $0x24] sm:$0xf]
    %v155 = vld [vmem:[#allocation5 + $0x28] sm:$0xf]
    %v156 = vld [vmem:[#allocation5 + $0x2c] sm:$0xf]
    %v157 = vld [vmem:[#allocation5 + $0x30] sm:$0xf]
    %v158 = vld [vmem:[#allocation5 + $0x34] sm:$0xf]
    %v159 = vld [vmem:[#allocation5 + $0x38] sm:$0xf]
    %v160 = vld [vmem:[#allocation5 + $0x3c] sm:$0xf]
    %v177 = vunpack.c.l.b16 %v145
    %v178 = vunpack.c.l.b16 %v146
    %v179 = vunpack.c.l.b16 %v147
    %v180 = vunpack.c.l.b16 %v148
    %v181 = vunpack.c.l.b16 %v149
    %v182 = vunpack.c.l.b16 %v150
    %v183 = vunpack.c.l.b16 %v151
    %v184 = vunpack.c.l.b16 %v152
    %v185 = vunpack.c.l.b16 %v153
    %v186 = vunpack.c.l.b16 %v154
    %v187 = vunpack.c.l.b16 %v155
    %v188 = vunpack.c.l.b16 %v156
    %v189 = vunpack.c.l.b16 %v157
    %v190 = vunpack.c.l.b16 %v158
    %v191 = vunpack.c.l.b16 %v159
    %v192 = vunpack.c.l.b16 %v160
    %v193 = vpack.c.b16 %v178, %v177
    %v194 = vpack.c.b16 %v180, %v179
    %v195 = vpack.c.b16 %v182, %v181
    %v196 = vpack.c.b16 %v184, %v183
    %v197 = vpack.c.b16 %v186, %v185
    %v198 = vpack.c.b16 %v188, %v187
    %v199 = vpack.c.b16 %v190, %v189
    %v200 = vpack.c.b16 %v192, %v191
    %209 = vmatpush.bf16.msra.mxu0 %v200
    %210 = vmatpush.bf16.msra.mxu0 %v199
    %211 = vmatpush.bf16.msra.mxu0 %v198
    %212 = vmatpush.bf16.msra.mxu0 %v197
    %213 = vmatpush.bf16.msra.mxu0 %v196
    %214 = vmatpush.bf16.msra.mxu0 %v195
    %215 = vmatpush.bf16.msra.mxu0 %v194
    %216 = vmatpush.bf16.msra.mxu0 %v193
    %217 = vmatmul.bf16.gmra.mxu0 %v144
    %v218 = vpop.f32.mrf.mxu0
    %v219 = vadd.f32 0.0, %v218
    %v220 = vpop.f32.mrf.mxu0
    %v221 = vadd.f32 0.0, %v220
    %222 = vdwg.mxu0
    %p223 = scmp.eq.s32.totalorder 0, 0
    // Predicated region
    $region30: #{_ffn_call.1} parent=1 // pred_check
      %p224 = pneg %p223
    $region31: #{_ffn_call.1} parent=1 // pred_check_branch
      %226 = sbr.rel (%p224) target = $region33
    $region32: #{_ffn_call.1} parent=1 // pred_region
      %227 = vst [vmem:[#allocation2] sm:$0xff] %v219
      %228 = vst [vmem:[#allocation2 + $0x8] sm:$0xff] %v221
    $region33: #{_ffn_call.1} parent=1 // pred_fallthru
      _
    %p229 = scmp.ne.s32.totalorder 0, 0
    // Predicated region
    $region34: #{_ffn_call.1} parent=1 // pred_check
      %p230 = pneg %p229
    $region35: #{_ffn_call.1} parent=1 // pred_check_branch
      %232 = sbr.rel (%p230) target = $region37
    $region36: #{_ffn_call.1} parent=1 // pred_region
      %v233 = vld [vmem:[#allocation2] sm:$0xff]
      %v234 = vld [vmem:[#allocation2 + $0x8] sm:$0xff]
      %v235 = vadd.f32 %v233, %v219
      %v236 = vadd.f32 %v234, %v221
      %237 = vst [vmem:[#allocation2] sm:$0xff] %v235
      %238 = vst [vmem:[#allocation2 + $0x8] sm:$0xff] %v236
    $region37: #{_ffn_call.1} parent=1 // pred_fallthru
      _
    // Predicated region
    $region38: #{_ffn_call.1} parent=1 // pred_check
      %p239 = pneg %p223
    $region39: #{_ffn_call.1} parent=1 // pred_check_branch
      %241 = sbr.rel (%p239) target = $region41
    $region40: #{_ffn_call.1} parent=1 // pred_region
      %v242 = vld [vmem:[#allocation2] sm:$0xff]
      %v243 = vld [vmem:[#allocation2 + $0x8] sm:$0xff]
      %v244 = vld [vmem:[%s4] sm:$0x1]
      %v246 = vperm.slane %v244, 0
      %v248 = vadd.f32 %v242, %v246
      %v249 = vadd.f32 %v243, %v246
      %250 = vst [vmem:[%s5] sm:$0xff] %v248
      %251 = vst [vmem:[%s5 + $0x8] sm:$0xff] %v249
    $region41: #{_ffn_call.1} parent=1 // pred_fallthru
      _
    // Predicated region
    $region42: #{_ffn_call.1} parent=1 // pred_check
      _
    $region43: #{_ffn_call.1} parent=1 // pred_check_branch
      %253 = sbr.rel (0) target = $region45
    $region44: #{_ffn_call.1} parent=1 // pred_region
      _
    $region45: #{_ffn_call.1} parent=1 // pred_fallthru
      _
    // Predicated region
    $region46: #{_ffn_call.1} parent=1 // pred_check
      _
    $region47: #{_ffn_call.1} parent=1 // pred_check_branch
      %255 = sbr.rel (0) target = $region49
    $region48: #{_ffn_call.1} parent=1 // pred_region
      _
    $region49: #{_ffn_call.1} parent=1 // pred_fallthru
      _
    %256 = vsyncpa [#allocation4], 1
    %257 = vsyncpa [#allocation6], 1

</llo_original>
